<compile_context>
chip_gen: v7x
topology: tpu7x:2x2x1
jax: 0.10.0
libtpu: 0.0.40
codegen_flags: <defaults>
</compile_context>

<pallas_src>
import functools

import jax
import jax.numpy as jnp
from jax import lax
from jax.experimental import pallas as pl
from jax.experimental.pallas import tpu as pltpu


def _round_up(v, m):
    return ((v + m - 1) // m) * m


_VMEM_CAP_CACHE = [None]


def _vmem_capacity_bytes():
    """Physical VMEM per core (v5e/v6e: 128 MiB, v7x: 64 MiB); safe fallback."""
    if _VMEM_CAP_CACHE[0] is None:
        cap = 64 * 1024 * 1024
        try:
            info = pltpu.get_tpu_info()
            cap = int(getattr(info, "vmem_capacity_bytes", cap))
        except Exception:
            pass
        _VMEM_CAP_CACHE[0] = cap
    return _VMEM_CAP_CACHE[0]


def _pad_cast(a, shape, dtype):
    """Cast (and zero-pad only when needed) — no extra HBM pass when aligned."""
    a = a.astype(dtype)
    if tuple(a.shape) == tuple(shape):
        return a
    return jnp.zeros(shape, dtype).at[tuple(slice(0, s) for s in a.shape)].set(a)


# ----------------------------------------------------------------------------
# Pass 0: feature transform.
#   support_i = x_i @ W           (stored in compute dtype — cast exactly once)
#   self_i    = x_i @ (W + W_s)   (kept f32, added directly to the accumulator)
# ----------------------------------------------------------------------------
def _feature_transform_kernel(x_ref, w_ref, wc_ref, sup_ref, self_ref):
    xv = x_ref[...]
    sup = jnp.dot(xv, w_ref[...], preferred_element_type=jnp.float32)
    slf = jnp.dot(xv, wc_ref[...], preferred_element_type=jnp.float32)
    sup_ref[...] = sup.astype(sup_ref.dtype)
    self_ref[...] = slf.astype(self_ref.dtype)


# ----------------------------------------------------------------------------
# Pass 1: neighbour aggregation over a (row-tile i, reduction-tile k) grid.
#   acc_i = sum_k adj[i,k] @ support_k  (+ self_i folded into the k==0 write)
#   out_i = relu(acc_i)   [+ fused PairNorm when g == 1]
#   Optionally emits per-row-tile PairNorm statistics for a tiled 2nd pass.
# ----------------------------------------------------------------------------
def _make_agg_kernel(emit_stats, fuse_pair_norm, n_real, pn_scale):
    inv_n = 1.0 / float(n_real)

    def kernel(adj_ref, sup_ref, self_ref, *outs):
        if emit_stats:
            out_ref, stats_ref, acc_ref = outs
        else:
            out_ref, acc_ref = outs

        k = pl.program_id(1)
        part = jnp.dot(adj_ref[...], sup_ref[...],
                       preferred_element_type=jnp.float32)

        @pl.when(k == 0)
        def _first():
            # Write (not zero-then-add) and fold the self term in one update.
            acc_ref[...] = part + self_ref[...]

        @pl.when(k != 0)
        def _accumulate():
            acc_ref[...] += part

        @pl.when(k == pl.num_programs(1) - 1)
        def _epilogue():
            h = jnp.maximum(acc_ref[...], 0.0)                 # relu (VPU, f32)
            if fuse_pair_norm:
                # Whole node dim resident: PairNorm fused in the epilogue.
                # sum_i ||h_i - mu||^2 = S2 - n*||mu||^2 (padded rows are 0).
                s1 = jnp.sum(h, axis=0, keepdims=True)
                s2 = jnp.sum(h * h)
                mu = s1 * inv_n
                var = s2 * inv_n - jnp.sum(mu * mu)
                inv = pn_scale * lax.rsqrt(var + 1e-6)         # EUP
                out_ref[...] = ((h - mu) * inv).astype(out_ref.dtype)
            else:
                out_ref[...] = h.astype(out_ref.dtype)
            if emit_stats:
                f = h.shape[1]
                cs = jnp.sum(h, axis=0, keepdims=True)          # [1, F] column sums
                ssq = jnp.sum(h * h)                            # scalar sum of squares
                ridx = lax.broadcasted_iota(jnp.int32, (8, f), 0)
                stats = jnp.where(ridx == 0, cs,
                                  jnp.where(ridx == 1, ssq, 0.0))
                stats_ref[...] = stats

    return kernel


# ----------------------------------------------------------------------------
# Pass 2 (only when pair_norm and g > 1): row-tiled normalize.
#   out = h * inv - (mu * inv)    with inv, mu*inv precomputed (tiny arrays).
# ----------------------------------------------------------------------------
def _pairnorm_apply_kernel(h_ref, scale_ref, shift_ref, o_ref):
    o_ref[...] = h_ref[...] * scale_ref[...] - shift_ref[...]


# ----------------------------------------------------------------------------
# Wrapper (jitted so pad/cast fuse into one pass with the kernel launch graph).
# ----------------------------------------------------------------------------
@functools.partial(jax.jit,
                   static_argnames=("pair_norm", "pn_scale", "compute_dtype", "tile"))
def graph_conv(x, adj, weight, self_weight, *, pair_norm=False, pn_scale=1.0,
               compute_dtype=jnp.bfloat16, tile=512):
    """GraphConv forward. x:[N,Fin], adj:[N,N], weight/self_weight:[Fin,Fout]."""
    n, f_in = x.shape
    f_out = weight.shape[1]
    dt = jnp.dtype(compute_dtype)

    # Lane-dense / tile-aligned padded shapes. Keep tile modest enough that
    # g >= 2 for large graphs (v7x megacore) while fitting VMEM comfortably.
    f_in_p = _round_up(f_in, 128)
    f_out_p = _round_up(f_out, 128)
    tile = max(128, _round_up(int(tile), 128))
    tile = min(tile, _round_up(n, 128))
    n_p = _round_up(n, tile)
    g = n_p // tile

    pn_scale_f = float(pn_scale)
    fuse_pn = pair_norm and g == 1
    emit_stats = pair_norm and g > 1

    # Padded / cast operands (skipped when already aligned; jit fuses pad+cast).
    xp = _pad_cast(x, (n_p, f_in_p), jnp.float32)
    adjp = _pad_cast(adj, (n_p, n_p), dt)
    wp = _pad_cast(weight, (f_in_p, f_out_p), jnp.float32)
    wcp = _pad_cast(weight + self_weight, (f_in_p, f_out_p), jnp.float32)

    # ---- Pass 0: support = x @ W (compute dtype), self = x @ (W + W_self) (f32).
    support, self_term = pl.pallas_call(
        _feature_transform_kernel,
        out_shape=(jax.ShapeDtypeStruct((n_p, f_out_p), dt),
                   jax.ShapeDtypeStruct((n_p, f_out_p), jnp.float32)),
        grid_spec=pltpu.PrefetchScalarGridSpec(
            num_scalar_prefetch=0,
            grid=(g,),
            in_specs=[
                pl.BlockSpec((tile, f_in_p), lambda i: (i, 0)),
                pl.BlockSpec((f_in_p, f_out_p), lambda i: (0, 0)),
                pl.BlockSpec((f_in_p, f_out_p), lambda i: (0, 0)),
            ],
            out_specs=[
                pl.BlockSpec((tile, f_out_p), lambda i: (i, 0)),
                pl.BlockSpec((tile, f_out_p), lambda i: (i, 0)),
            ]),
        compiler_params=pltpu.CompilerParams(dimension_semantics=("parallel",)),
    )(xp, wp, wcp)

    # ---- Pass 1: adjacency aggregation (HBM-bound on the [N,N] adj stream).
    # VMEM budget: double-buffered adj / support / self / out tiles + accumulator.
    est = (2 * tile * tile * dt.itemsize
           + 2 * tile * f_out_p * dt.itemsize
           + 2 * tile * f_out_p * 4
           + 2 * tile * f_out_p * 4
           + tile * f_out_p * 4)
    cap = _vmem_capacity_bytes()
    vmem_limit = int(min(int(0.75 * cap), max(32 * 1024 * 1024, 2 * est)))

    cost = pl.CostEstimate(
        flops=int(2 * n_p * n_p * f_out_p + n_p * f_out_p),
        transcendentals=1 if fuse_pn else 0,
        bytes_accessed=int(n_p * n_p * dt.itemsize            # adjacency (dominant)
                           + g * n_p * f_out_p * dt.itemsize  # support, re-streamed per i
                           + n_p * f_out_p * 4                # self term
                           + n_p * f_out_p * 4),              # output
    )

    kernel = _make_agg_kernel(emit_stats, fuse_pn, n, pn_scale_f)

    if emit_stats:
        out_shape = (jax.ShapeDtypeStruct((n_p, f_out_p), jnp.float32),
                     jax.ShapeDtypeStruct((g, 8, f_out_p), jnp.float32))
        out_specs = (pl.BlockSpec((tile, f_out_p), lambda i, k: (i, 0)),
                     pl.BlockSpec((None, 8, f_out_p), lambda i, k: (i, 0, 0)))
    else:
        out_shape = jax.ShapeDtypeStruct((n_p, f_out_p), jnp.float32)
        out_specs = pl.BlockSpec((tile, f_out_p), lambda i, k: (i, 0))

    result = pl.pallas_call(
        kernel,
        out_shape=out_shape,
        grid_spec=pltpu.PrefetchScalarGridSpec(
            num_scalar_prefetch=0,
            grid=(g, g),
            in_specs=[
                pl.BlockSpec((tile, tile), lambda i, k: (i, k)),       # adj tile
                pl.BlockSpec((tile, f_out_p), lambda i, k: (k, 0)),    # support (rows k)
                pl.BlockSpec((tile, f_out_p), lambda i, k: (i, 0)),    # self term (rows i)
            ],
            out_specs=out_specs,
            scratch_shapes=[pltpu.VMEM((tile, f_out_p), jnp.float32)],
        ),
        compiler_params=pltpu.CompilerParams(
            dimension_semantics=("parallel", "arbitrary"),
            vmem_limit_bytes=vmem_limit),
        cost_estimate=cost,
    )(adjp, support, self_term)

    if emit_stats:
        out_p, stats = result
        # Tiny cross-tile reduction of the per-tile statistics (g x F values).
        s1 = jnp.sum(stats[:, 0, :], axis=0)                 # column sums     [F]
        s2 = jnp.sum(stats[:, 1, 0])                         # sum of squares  scalar
        inv_n = 1.0 / n
        mu = s1 * inv_n
        var = s2 * inv_n - jnp.sum(mu * mu)
        inv = pn_scale_f * lax.rsqrt(var + 1e-6)
        scale_row = jnp.broadcast_to(inv, (1, f_out_p)).astype(jnp.float32)
        shift_row = (mu * inv).reshape(1, f_out_p).astype(jnp.float32)

        # ---- Pass 2: row-tiled normalize (scales to any N; no full-array block).
        out_p = pl.pallas_call(
            _pairnorm_apply_kernel,
            out_shape=jax.ShapeDtypeStruct((n_p, f_out_p), jnp.float32),
            grid_spec=pltpu.PrefetchScalarGridSpec(
                num_scalar_prefetch=0,
                grid=(g,),
                in_specs=[
                    pl.BlockSpec((tile, f_out_p), lambda i: (i, 0)),
                    pl.BlockSpec((1, f_out_p), lambda i: (0, 0)),
                    pl.BlockSpec((1, f_out_p), lambda i: (0, 0)),
                ],
                out_specs=pl.BlockSpec((tile, f_out_p), lambda i: (i, 0))),
            compiler_params=pltpu.CompilerParams(
                dimension_semantics=("parallel",)),
        )(out_p, scale_row, shift_row)
    else:
        out_p = result

    return out_p[:n, :f_out]


# ----------------------------------------------------------------------------
# Pure-JAX reference mirroring the PyTorch forward.
# ----------------------------------------------------------------------------
def graph_conv_ref(x, adj, weight, self_weight, *, pair_norm=False, pn_scale=1.0):
    hp = lax.Precision.HIGHEST
    support = jnp.dot(x, weight, precision=hp)
    adj_sl = jnp.eye(x.shape[0], dtype=x.dtype) + adj
    out = jnp.dot(adj_sl, support, precision=hp) + jnp.dot(x, self_weight, precision=hp)
    out = jnp.maximum(out, 0.0)
    if pair_norm:
        out = out - jnp.mean(out, axis=0, keepdims=True)
        rownorm_mean = jnp.sqrt(jnp.mean(jnp.sum(out ** 2, axis=1) + 1e-6))
        out = pn_scale * out / rownorm_mean
    return out


def xavier_uniform(key, fan_in, fan_out):
    bound = jnp.sqrt(6.0 / (fan_in + fan_out))
    return jax.random.uniform(key, (fan_in, fan_out), jnp.float32, -bound, bound)


def _make_graph(key, n, f_in, f_out):
    k_x, k_a, k_w, k_ws = jax.random.split(key, 4)
    x = jax.random.normal(k_x, (n, f_in), jnp.float32)
    a_raw = (jax.random.uniform(k_a, (n, n)) < 0.3).astype(jnp.float32)
    adj = jnp.maximum(a_raw, a_raw.T) * (1.0 - jnp.eye(n, dtype=jnp.float32))
    w = xavier_uniform(k_w, f_in, f_out)
    ws = xavier_uniform(k_ws, f_in, f_out)
    return x, adj, w, ws


if __name__ == "__main__":
    key = jax.random.PRNGKey(0)
    k1, k2 = jax.random.split(key)

    f32 = jnp.float32

    # --- Case 1: tiny graph -> single (128,128) tile, PairNorm fused in epilogue.
    N1, FI1, FO1 = 8, 16, 32
    x1, adj1, w1, ws1 = _make_graph(k1, N1, FI1, FO1)
    out1 = graph_conv(x1, adj1, w1, ws1, pair_norm=False, compute_dtype=f32)
    out1_pn = graph_conv(x1, adj1, w1, ws1, pair_norm=True, pn_scale=1.0,
                         compute_dtype=f32)
    jax.block_until_ready(out1)
    jax.block_until_ready(out1_pn)
    ref1 = graph_conv_ref(x1, adj1, w1, ws1, pair_norm=False)
    ref1_pn = graph_conv_ref(x1, adj1, w1, ws1, pair_norm=True, pn_scale=1.0)
    assert out1.shape == (N1, FO1)
    assert jnp.allclose(out1, ref1, atol=1e-3, rtol=1e-3), \
        float(jnp.max(jnp.abs(out1 - ref1)))
    assert jnp.allclose(out1_pn, ref1_pn, atol=1e-3, rtol=1e-3), \
        float(jnp.max(jnp.abs(out1_pn - ref1_pn)))

    # --- Case 2: larger graph -> (3,3) tiled grid; PairNorm via fused stats
    #     in the GCN epilogue + a row-tiled normalize pass.
    N2, FI2, FO2 = 300, 48, 32
    x2, adj2, w2, ws2 = _make_graph(k2, N2, FI2, FO2)
    out2 = graph_conv(x2, adj2, w2, ws2, pair_norm=False, compute_dtype=f32, tile=128)
    out2_pn = graph_conv(x2, adj2, w2, ws2, pair_norm=True, compute_dtype=f32, tile=128)
    jax.block_until_ready(out2)
    jax.block_until_ready(out2_pn)
    ref2 = graph_conv_ref(x2, adj2, w2, ws2, pair_norm=False)
    ref2_pn = graph_conv_ref(x2, adj2, w2, ws2, pair_norm=True)
    assert out2.shape == (N2, FO2)
    assert jnp.allclose(out2, ref2, atol=2e-3, rtol=2e-3), \
        float(jnp.max(jnp.abs(out2 - ref2)))
    assert jnp.allclose(out2_pn, ref2_pn, atol=2e-3, rtol=2e-3), \
        float(jnp.max(jnp.abs(out2_pn - ref2_pn)))

    # --- Case 3: default bf16 adjacency/support path (f32 accumulation).
    out2_bf = graph_conv(x2, adj2, w2, ws2, tile=128)   # compute_dtype=bfloat16 default
    jax.block_until_ready(out2_bf)
    assert jnp.allclose(out2_bf, ref2, atol=0.5, rtol=0.05), \
        float(jnp.max(jnp.abs(out2_bf - ref2)))

    print("KERNEL_OK")
</pallas_src>

<mosaic_0001>
module attributes {stable_mosaic.version = 11 : i64} {
  func.func @_feature_transform_kernel(%arg0: i32, %arg1: memref<128x128xf32, #tpu.memory_space<vmem>>, %arg2: memref<128x128xf32, #tpu.memory_space<vmem>>, %arg3: memref<128x128xf32, #tpu.memory_space<vmem>>, %arg4: memref<128x128xf32, #tpu.memory_space<vmem>>, %arg5: memref<128x128xf32, #tpu.memory_space<vmem>>) attributes {dimension_semantics = [#tpu.dimension_semantics<parallel>], iteration_bounds = array<i64: 1>, scalar_prefetch = 0 : i64, scratch_operands = 0 : i64, tpu.core_type = #tpu.core_type<tc>, window_params = [{transform_indices = @transform_0, window_bounds = array<i64: 128, 128>}, {pipeline_mode = #tpu.pipeline_mode<synchronous>, transform_indices = @transform_1, window_bounds = array<i64: 128, 128>}, {pipeline_mode = #tpu.pipeline_mode<synchronous>, transform_indices = @transform_2, window_bounds = array<i64: 128, 128>}, {transform_indices = @transform_3, window_bounds = array<i64: 128, 128>}, {transform_indices = @transform_4, window_bounds = array<i64: 128, 128>}]} {
    %c0 = arith.constant 0 : index
    %c0_0 = arith.constant 0 : index
    %0 = vector.load %arg1[%c0, %c0_0] : memref<128x128xf32, #tpu.memory_space<vmem>>, vector<128x128xf32>
    %c0_1 = arith.constant 0 : index
    %c0_2 = arith.constant 0 : index
    %1 = vector.load %arg2[%c0_1, %c0_2] : memref<128x128xf32, #tpu.memory_space<vmem>>, vector<128x128xf32>
    %cst = arith.constant dense<0.000000e+00> : vector<128x128xf32>
    %2 = tpu.matmul %0, %1, %cst {dimension_numbers = #tpu.dot_dimension_numbers<[1], [0], [0], [1], [0, 0, 1, 1], [], []>} : vector<128x128xf32>, vector<128x128xf32>, vector<128x128xf32> -> vector<128x128xf32>
    %c0_3 = arith.constant 0 : index
    %c0_4 = arith.constant 0 : index
    %3 = vector.load %arg3[%c0_3, %c0_4] : memref<128x128xf32, #tpu.memory_space<vmem>>, vector<128x128xf32>
    %cst_5 = arith.constant dense<0.000000e+00> : vector<128x128xf32>
    %4 = tpu.matmul %0, %3, %cst_5 {dimension_numbers = #tpu.dot_dimension_numbers<[1], [0], [0], [1], [0, 0, 1, 1], [], []>} : vector<128x128xf32>, vector<128x128xf32>, vector<128x128xf32> -> vector<128x128xf32>
    %c0_6 = arith.constant 0 : index
    %c0_7 = arith.constant 0 : index
    %5 = vector.load %arg4[%c0_6, %c0_7] : memref<128x128xf32, #tpu.memory_space<vmem>>, vector<128x128xf32>
    tpu.vector_store %arg4[%c0_6, %c0_7], %2 {strides = array<i32>} : memref<128x128xf32, #tpu.memory_space<vmem>>, vector<128x128xf32>,
    %c0_8 = arith.constant 0 : index
    %c0_9 = arith.constant 0 : index
    %6 = vector.load %arg5[%c0_8, %c0_9] : memref<128x128xf32, #tpu.memory_space<vmem>>, vector<128x128xf32>
    tpu.vector_store %arg5[%c0_8, %c0_9], %4 {strides = array<i32>} : memref<128x128xf32, #tpu.memory_space<vmem>>, vector<128x128xf32>,
    return
  }
  func.func @transform_0(%arg0: i32) -> (i32, i32) {
    %c0_i32 = arith.constant 0 : i32
    %c0_i32_0 = arith.constant 0 : i32
    return %arg0, %c0_i32 : i32, i32
  }
  func.func @transform_1(%arg0: i32) -> (i32, i32) {
    %c0_i32 = arith.constant 0 : i32
    %c0_i32_0 = arith.constant 0 : i32
    %c0_i32_1 = arith.constant 0 : i32
    return %c0_i32, %c0_i32_0 : i32, i32
  }
  func.func @transform_2(%arg0: i32) -> (i32, i32) {
    %c0_i32 = arith.constant 0 : i32
    %c0_i32_0 = arith.constant 0 : i32
    %c0_i32_1 = arith.constant 0 : i32
    return %c0_i32, %c0_i32_0 : i32, i32
  }
  func.func @transform_3(%arg0: i32) -> (i32, i32) {
    %c0_i32 = arith.constant 0 : i32
    %c0_i32_0 = arith.constant 0 : i32
    return %arg0, %c0_i32 : i32, i32
  }
  func.func @transform_4(%arg0: i32) -> (i32, i32) {
    %c0_i32 = arith.constant 0 : i32
    %c0_i32_0 = arith.constant 0 : i32
    return %arg0, %c0_i32 : i32, i32
  }
}

module attributes {stable_mosaic.version = 11 : i64} {
  func.func @kernel(%arg0: i32, %arg1: i32, %arg2: memref<128x128xf32, #tpu.memory_space<vmem>>, %arg3: memref<128x128xf32, #tpu.memory_space<vmem>>, %arg4: memref<128x128xf32, #tpu.memory_space<vmem>>, %arg5: memref<128x128xf32, #tpu.memory_space<vmem>>, %arg6: memref<128x128xf32, #tpu.memory_space<vmem>>) attributes {dimension_semantics = [#tpu.dimension_semantics<parallel>, #tpu.dimension_semantics<arbitrary>], iteration_bounds = array<i64: 1, 1>, scalar_prefetch = 0 : i64, scratch_operands = 1 : i64, tpu.core_type = #tpu.core_type<tc>, window_params = [{transform_indices = @transform_0, window_bounds = array<i64: 128, 128>}, {transform_indices = @transform_1, window_bounds = array<i64: 128, 128>}, {transform_indices = @transform_2, window_bounds = array<i64: 128, 128>}, {transform_indices = @transform_3, window_bounds = array<i64: 128, 128>}]} {
    %c0 = arith.constant 0 : index
    %c0_0 = arith.constant 0 : index
    %0 = vector.load %arg2[%c0, %c0_0] : memref<128x128xf32, #tpu.memory_space<vmem>>, vector<128x128xf32>
    %c0_1 = arith.constant 0 : index
    %c0_2 = arith.constant 0 : index
    %1 = vector.load %arg3[%c0_1, %c0_2] : memref<128x128xf32, #tpu.memory_space<vmem>>, vector<128x128xf32>
    %cst = arith.constant dense<0.000000e+00> : vector<128x128xf32>
    %2 = tpu.matmul %0, %1, %cst {dimension_numbers = #tpu.dot_dimension_numbers<[1], [0], [0], [1], [0, 0, 1, 1], [], []>} : vector<128x128xf32>, vector<128x128xf32>, vector<128x128xf32> -> vector<128x128xf32>
    %c0_i32 = arith.constant 0 : i32
    %3 = arith.cmpi eq, %arg1, %c0_i32 : i32
    %4 = arith.extui %3 : i1 to i32
    %c0_i32_3 = arith.constant 0 : i32
    %5 = arith.cmpi ne, %4, %c0_i32_3 : i32
    scf.if %5 {
      %c0_8 = arith.constant 0 : index
      %c0_9 = arith.constant 0 : index
      %12 = vector.load %arg4[%c0_8, %c0_9] : memref<128x128xf32, #tpu.memory_space<vmem>>, vector<128x128xf32>
      %13 = arith.addf %2, %12 : vector<128x128xf32>
      %c0_10 = arith.constant 0 : index
      %c0_11 = arith.constant 0 : index
      %14 = vector.load %arg6[%c0_10, %c0_11] : memref<128x128xf32, #tpu.memory_space<vmem>>, vector<128x128xf32>
      tpu.vector_store %arg6[%c0_10, %c0_11], %13 {strides = array<i32>} : memref<128x128xf32, #tpu.memory_space<vmem>>, vector<128x128xf32>,
    } else {
    }
    %c0_i32_4 = arith.constant 0 : i32
    %6 = arith.cmpi ne, %arg1, %c0_i32_4 : i32
    %7 = arith.extui %6 : i1 to i32
    %c0_i32_5 = arith.constant 0 : i32
    %8 = arith.cmpi ne, %7, %c0_i32_5 : i32
    scf.if %8 {
      %c0_8 = arith.constant 0 : index
      %c0_9 = arith.constant 0 : index
      %12 = vector.load %arg6[%c0_8, %c0_9] : memref<128x128xf32, #tpu.memory_space<vmem>>, vector<128x128xf32>
      %13 = arith.addf %12, %2 : vector<128x128xf32>
      %c0_10 = arith.constant 0 : index
      %c0_11 = arith.constant 0 : index
      %14 = vector.load %arg6[%c0_10, %c0_11] : memref<128x128xf32, #tpu.memory_space<vmem>>, vector<128x128xf32>
      tpu.vector_store %arg6[%c0_10, %c0_11], %13 {strides = array<i32>} : memref<128x128xf32, #tpu.memory_space<vmem>>, vector<128x128xf32>,
    } else {
    }
    %c0_i32_6 = arith.constant 0 : i32
    %9 = arith.cmpi eq, %arg1, %c0_i32_6 : i32
    %10 = arith.extui %9 : i1 to i32
    %c0_i32_7 = arith.constant 0 : i32
    %11 = arith.cmpi ne, %10, %c0_i32_7 : i32
    scf.if %11 {
      %c0_8 = arith.constant 0 : index
      %c0_9 = arith.constant 0 : index
      %12 = vector.load %arg6[%c0_8, %c0_9] : memref<128x128xf32, #tpu.memory_space<vmem>>, vector<128x128xf32>
      %cst_10 = arith.constant 0.000000e+00 : f32
      %13 = vector.broadcast %cst_10 : f32 to vector<128x128xf32>
      %14 = arith.maximumf %12, %13 : vector<128x128xf32>
      %c0_11 = arith.constant 0 : index
      %c0_12 = arith.constant 0 : index
      %15 = vector.load %arg5[%c0_11, %c0_12] : memref<128x128xf32, #tpu.memory_space<vmem>>, vector<128x128xf32>
      tpu.vector_store %arg5[%c0_11, %c0_12], %14 {strides = array<i32>} : memref<128x128xf32, #tpu.memory_space<vmem>>, vector<128x128xf32>,
    } else {
    }
    return
  }
  func.func @transform_0(%arg0: i32, %arg1: i32) -> (i32, i32) {
    %c0_i32 = arith.constant 0 : i32
    return %arg0, %arg1 : i32, i32
  }
  func.func @transform_1(%arg0: i32, %arg1: i32) -> (i32, i32) {
    %c0_i32 = arith.constant 0 : i32
    %c0_i32_0 = arith.constant 0 : i32
    return %arg1, %c0_i32 : i32, i32
  }
  func.func @transform_2(%arg0: i32, %arg1: i32) -> (i32, i32) {
    %c0_i32 = arith.constant 0 : i32
    %c0_i32_0 = arith.constant 0 : i32
    return %arg0, %c0_i32 : i32, i32
  }
  func.func @transform_3(%arg0: i32, %arg1: i32) -> (i32, i32) {
    %c0_i32 = arith.constant 0 : i32
    %c0_i32_0 = arith.constant 0 : i32
    return %arg0, %c0_i32 : i32, i32
  }
}

</mosaic_0001>

<llo_original>
// kernel: graph_conv.2
$region0: #{graph_conv.2}
  #allocation0 [shape = 'u32[]', space=smem, size = 0x4, offset = 0x4, fixed_abs, tag = 'smem constant byte address 0x4 - core index']
  #allocation1 [shape = 'u32[144,128]{1,0:T(1,128)}', space=vmem, size = 0x12000, scoped, tag = 'internal scratch']
  %s0 = inlined_call_operand.vmem [shape: f32[128,128], index: 0, kind: input, shape index: {}]
  %s1 = inlined_call_operand.vmem [shape: f32[128,128], index: 1, kind: input, shape index: {}]
  %s2 = inlined_call_operand.vmem [shape: f32[128,128], index: 2, kind: input, shape index: {}]
  %s3 = inlined_call_operand.vmem [shape: f32[128,128], index: 3, kind: output, shape index: {0}]
  %s4 = inlined_call_operand.vmem [shape: f32[128,128], index: 4, kind: output, shape index: {1}]
  %5 = xla_tuple %s3, %s4
  %s6 = sld [smem:[#allocation0]]
  $region30: #{graph_conv.2} parent=0
    _
  %s8 = ssub.s32 1, %s6
  %s9 = scalar_select 0, %s8, %s6
  // Predicated region
  $region2: #{graph_conv.2} parent=0 // pred_check
    _
  $region3: #{graph_conv.2} parent=0 // pred_check_branch
    %11 = sbr.rel (0) target = $region5
  $region4: #{graph_conv.2} parent=0 // pred_region
    _
  $region5: #{graph_conv.2} parent=0 // pred_fallthru
    _
  // Predicated region
  $region6: #{graph_conv.2} parent=0 // pred_check
    _
  $region7: #{graph_conv.2} parent=0 // pred_check_branch
    %13 = sbr.rel (0) target = $region9
  $region8: #{graph_conv.2} parent=0 // pred_region
    _
  $region9: #{graph_conv.2} parent=0 // pred_fallthru
    _
  // Predicated region
  $region10: #{graph_conv.2} parent=0 // pred_check
    _
  $region11: #{graph_conv.2} parent=0 // pred_check_branch
    %15 = sbr.rel (0) target = $region13
  $region12: #{graph_conv.2} parent=0 // pred_region
    _
  $region13: #{graph_conv.2} parent=0 // pred_fallthru
    _
  %v16 = vld [vmem:[%s0] sm:$0xff]
  %v17 = vld [vmem:[%s0 + $0x8] sm:$0xff]
  %v18 = vld [vmem:[%s0 + $0x10] sm:$0xff]
  %v19 = vld [vmem:[%s0 + $0x18] sm:$0xff]
  %v20 = vld [vmem:[%s0 + $0x20] sm:$0xff]
  %v21 = vld [vmem:[%s0 + $0x28] sm:$0xff]
  %v22 = vld [vmem:[%s0 + $0x30] sm:$0xff]
  %v23 = vld [vmem:[%s0 + $0x38] sm:$0xff]
  %v24 = vld [vmem:[%s0 + $0x40] sm:$0xff]
  %v25 = vld [vmem:[%s0 + $0x48] sm:$0xff]
  %v26 = vld [vmem:[%s0 + $0x50] sm:$0xff]
  %v27 = vld [vmem:[%s0 + $0x58] sm:$0xff]
  %v28 = vld [vmem:[%s0 + $0x60] sm:$0xff]
  %v29 = vld [vmem:[%s0 + $0x68] sm:$0xff]
  %v30 = vld [vmem:[%s0 + $0x70] sm:$0xff]
  %v31 = vld [vmem:[%s0 + $0x78] sm:$0xff]
  %v32 = vld [vmem:[%s1] sm:$0xff]
  %v33 = vld [vmem:[%s1 + $0x8] sm:$0xff]
  %v34 = vld [vmem:[%s1 + $0x10] sm:$0xff]
  %v35 = vld [vmem:[%s1 + $0x18] sm:$0xff]
  %v36 = vld [vmem:[%s1 + $0x20] sm:$0xff]
  %v37 = vld [vmem:[%s1 + $0x28] sm:$0xff]
  %v38 = vld [vmem:[%s1 + $0x30] sm:$0xff]
  %v39 = vld [vmem:[%s1 + $0x38] sm:$0xff]
  %v40 = vld [vmem:[%s1 + $0x40] sm:$0xff]
  %v41 = vld [vmem:[%s1 + $0x48] sm:$0xff]
  %v42 = vld [vmem:[%s1 + $0x50] sm:$0xff]
  %v43 = vld [vmem:[%s1 + $0x58] sm:$0xff]
  %v44 = vld [vmem:[%s1 + $0x60] sm:$0xff]
  %v45 = vld [vmem:[%s1 + $0x68] sm:$0xff]
  %v46 = vld [vmem:[%s1 + $0x70] sm:$0xff]
  %v47 = vld [vmem:[%s1 + $0x78] sm:$0xff]
  %48 = vmatprep.subr.mxu0 0.0
  %49 = vmatpush1.msra.mxu0 %v32
  %50 = vmatprep.subr.mxu0 0.0
  %51 = vmatpush1.msra.mxu0 %v33
  %52 = vmatprep.subr.mxu0 0.0
  %53 = vmatpush1.msra.mxu0 %v34
  %54 = vmatprep.subr.mxu0 0.0
  %55 = vmatpush1.msra.mxu0 %v35
  %56 = vmatprep.subr.mxu0 0.0
  %57 = vmatpush1.msra.mxu0 %v36
  %58 = vmatprep.subr.mxu0 0.0
  %59 = vmatpush1.msra.mxu0 %v37
  %60 = vmatprep.subr.mxu0 0.0
  %61 = vmatpush1.msra.mxu0 %v38
  %62 = vmatprep.subr.mxu0 0.0
  %63 = vmatpush1.msra.mxu0 %v39
  %64 = vmatprep.subr.mxu0 0.0
  %65 = vmatpush1.msra.mxu0 %v40
  %66 = vmatprep.subr.mxu0 0.0
  %67 = vmatpush1.msra.mxu0 %v41
  %68 = vmatprep.subr.mxu0 0.0
  %69 = vmatpush1.msra.mxu0 %v42
  %70 = vmatprep.subr.mxu0 0.0
  %71 = vmatpush1.msra.mxu0 %v43
  %72 = vmatprep.subr.mxu0 0.0
  %73 = vmatpush1.msra.mxu0 %v44
  %74 = vmatprep.subr.mxu0 0.0
  %75 = vmatpush1.msra.mxu0 %v45
  %76 = vmatprep.subr.mxu0 0.0
  %77 = vmatpush1.msra.mxu0 %v46
  %78 = vmatprep.subr.mxu0 0.0
  %79 = vmatpush1.msra.mxu0 %v47
  %80 = vmatprep.subr.mxu0 0.0
  %81 = vmatpush1.msra.mxu0 0.0
  %82 = vmatprep.subr.mxu0 0.0
  %83 = vmatpush1.msra.mxu0 0.0
  %84 = vmatprep.subr.mxu0 0.0
  %85 = vmatpush1.msra.mxu0 0.0
  %86 = vmatprep.subr.mxu0 0.0
  %87 = vmatpush1.msra.mxu0 0.0
  %88 = vmatprep.subr.mxu0 0.0
  %89 = vmatpush1.msra.mxu0 0.0
  %90 = vmatprep.subr.mxu0 0.0
  %91 = vmatpush1.msra.mxu0 0.0
  %92 = vmatprep.subr.mxu0 0.0
  %93 = vmatpush1.msra.mxu0 0.0
  %94 = vmatprep.subr.mxu0 0.0
  %95 = vmatpush1.msra.mxu0 0.0
  %96 = vmatprep.subr.mxu0 0.0
  %97 = vmatpush1.msra.mxu0 0.0
  %98 = vmatprep.subr.mxu0 0.0
  %99 = vmatpush1.msra.mxu0 0.0
  %100 = vmatprep.subr.mxu0 0.0
  %101 = vmatpush1.msra.mxu0 0.0
  %102 = vmatprep.subr.mxu0 0.0
  %103 = vmatpush1.msra.mxu0 0.0
  %104 = vmatprep.subr.mxu0 0.0
  %105 = vmatpush1.msra.mxu0 0.0
  %106 = vmatprep.subr.mxu0 0.0
  %107 = vmatpush1.msra.mxu0 0.0
  %108 = vmatprep.subr.mxu0 0.0
  %109 = vmatpush1.msra.mxu0 0.0
  %110 = vmatprep.subr.mxu0 0.0
  %111 = vmatpush1.msra.mxu0 0.0
  %112 = vmatprep.mubr.f32.mxu0 0.0
  %113 = vmatmul.mubr.f32.gmra.mrb[0].mxu0 %v16
  %v114 = vpop.f32.mrb[0].mxu0
  %v115 = vadd.f32 0.0, %v114
  %v116 = vpop.f32.mrb[0].mxu0
  %117 = vmatprep.mubr.f32.mxu0 0.0
  %118 = vmatmul.mubr.f32.gmra.mrb[0].mxu0 %v17
  %v119 = vpop.f32.mrb[0].mxu0
  %v120 = vadd.f32 0.0, %v119
  %v121 = vpop.f32.mrb[0].mxu0
  %122 = vmatprep.mubr.f32.mxu0 0.0
  %123 = vmatmul.mubr.f32.gmra.mrb[0].mxu0 %v18
  %v124 = vpop.f32.mrb[0].mxu0
  %v125 = vadd.f32 0.0, %v124
  %v126 = vpop.f32.mrb[0].mxu0
  %127 = vmatprep.mubr.f32.mxu0 0.0
  %128 = vmatmul.mubr.f32.gmra.mrb[0].mxu0 %v19
  %v129 = vpop.f32.mrb[0].mxu0
  %v130 = vadd.f32 0.0, %v129
  %v131 = vpop.f32.mrb[0].mxu0
  %132 = vmatprep.mubr.f32.mxu0 0.0
  %133 = vmatmul.mubr.f32.gmra.mrb[0].mxu0 %v20
  %v134 = vpop.f32.mrb[0].mxu0
  %v135 = vadd.f32 0.0, %v134
  %v136 = vpop.f32.mrb[0].mxu0
  %137 = vmatprep.mubr.f32.mxu0 0.0
  %138 = vmatmul.mubr.f32.gmra.mrb[0].mxu0 %v21
  %v139 = vpop.f32.mrb[0].mxu0
  %v140 = vadd.f32 0.0, %v139
  %v141 = vpop.f32.mrb[0].mxu0
  %142 = vmatprep.mubr.f32.mxu0 0.0
  %143 = vmatmul.mubr.f32.gmra.mrb[0].mxu0 %v22
  %v144 = vpop.f32.mrb[0].mxu0
  %v145 = vadd.f32 0.0, %v144
  %v146 = vpop.f32.mrb[0].mxu0
  %147 = vmatprep.mubr.f32.mxu0 0.0
  %148 = vmatmul.mubr.f32.gmra.mrb[0].mxu0 %v23
  %v149 = vpop.f32.mrb[0].mxu0
  %v150 = vadd.f32 0.0, %v149
  %v151 = vpop.f32.mrb[0].mxu0
  %152 = vmatprep.mubr.f32.mxu0 0.0
  %153 = vmatmul.mubr.f32.gmra.mrb[0].mxu0 %v24
  %v154 = vpop.f32.mrb[0].mxu0
  %v155 = vadd.f32 0.0, %v154
  %v156 = vpop.f32.mrb[0].mxu0
  %157 = vmatprep.mubr.f32.mxu0 0.0
  %158 = vmatmul.mubr.f32.gmra.mrb[0].mxu0 %v25
  %v159 = vpop.f32.mrb[0].mxu0
  %v160 = vadd.f32 0.0, %v159
  %v161 = vpop.f32.mrb[0].mxu0
  %162 = vmatprep.mubr.f32.mxu0 0.0
  %163 = vmatmul.mubr.f32.gmra.mrb[0].mxu0 %v26
  %v164 = vpop.f32.mrb[0].mxu0
  %v165 = vadd.f32 0.0, %v164
  %v166 = vpop.f32.mrb[0].mxu0
  %167 = vmatprep.mubr.f32.mxu0 0.0
  %168 = vmatmul.mubr.f32.gmra.mrb[0].mxu0 %v27
  %v169 = vpop.f32.mrb[0].mxu0
  %v170 = vadd.f32 0.0, %v169
  %v171 = vpop.f32.mrb[0].mxu0
  %172 = vmatprep.mubr.f32.mxu0 0.0
  %173 = vmatmul.mubr.f32.gmra.mrb[0].mxu0 %v28
  %v174 = vpop.f32.mrb[0].mxu0
  %v175 = vadd.f32 0.0, %v174
  %v176 = vpop.f32.mrb[0].mxu0
  %177 = vmatprep.mubr.f32.mxu0 0.0
  %178 = vmatmul.mubr.f32.gmra.mrb[0].mxu0 %v29
  %v179 = vpop.f32.mrb[0].mxu0
  %v180 = vadd.f32 0.0, %v179
  %v181 = vpop.f32.mrb[0].mxu0
  %182 = vmatprep.mubr.f32.mxu0 0.0
  %183 = vmatmul.mubr.f32.gmra.mrb[0].mxu0 %v30
  %v184 = vpop.f32.mrb[0].mxu0
  %v185 = vadd.f32 0.0, %v184
  %v186 = vpop.f32.mrb[0].mxu0
  %187 = vmatprep.mubr.f32.mxu0 0.0
  %188 = vmatmul.mubr.f32.gmra.mrb[0].mxu0 %v31
  %v189 = vpop.f32.mrb[0].mxu0
  %v190 = vadd.f32 0.0, %v189
  %v191 = vpop.f32.mrb[0].mxu0
  %192 = vdwg.mxu0
  %v193 = vld [vmem:[%s2] sm:$0xff]
  %v194 = vld [vmem:[%s2 + $0x8] sm:$0xff]
  %v195 = vld [vmem:[%s2 + $0x10] sm:$0xff]
  %v196 = vld [vmem:[%s2 + $0x18] sm:$0xff]
  %v197 = vld [vmem:[%s2 + $0x20] sm:$0xff]
  %v198 = vld [vmem:[%s2 + $0x28] sm:$0xff]
  %v199 = vld [vmem:[%s2 + $0x30] sm:$0xff]
  %v200 = vld [vmem:[%s2 + $0x38] sm:$0xff]
  %v201 = vld [vmem:[%s2 + $0x40] sm:$0xff]
  %v202 = vld [vmem:[%s2 + $0x48] sm:$0xff]
  %v203 = vld [vmem:[%s2 + $0x50] sm:$0xff]
  %v204 = vld [vmem:[%s2 + $0x58] sm:$0xff]
  %v205 = vld [vmem:[%s2 + $0x60] sm:$0xff]
  %v206 = vld [vmem:[%s2 + $0x68] sm:$0xff]
  %v207 = vld [vmem:[%s2 + $0x70] sm:$0xff]
  %v208 = vld [vmem:[%s2 + $0x78] sm:$0xff]
  %209 = vmatprep.subr.mxu0 0.0
  %210 = vmatpush1.msra.mxu0 %v193
  %211 = vmatprep.subr.mxu0 0.0
  %212 = vmatpush1.msra.mxu0 %v194
  %213 = vmatprep.subr.mxu0 0.0
  %214 = vmatpush1.msra.mxu0 %v195
  %215 = vmatprep.subr.mxu0 0.0
  %216 = vmatpush1.msra.mxu0 %v196
  %217 = vmatprep.subr.mxu0 0.0
  %218 = vmatpush1.msra.mxu0 %v197
  %219 = vmatprep.subr.mxu0 0.0
  %220 = vmatpush1.msra.mxu0 %v198
  %221 = vmatprep.subr.mxu0 0.0
  %222 = vmatpush1.msra.mxu0 %v199
  %223 = vmatprep.subr.mxu0 0.0
  %224 = vmatpush1.msra.mxu0 %v200
  %225 = vmatprep.subr.mxu0 0.0
  %226 = vmatpush1.msra.mxu0 %v201
  %227 = vmatprep.subr.mxu0 0.0
  %228 = vmatpush1.msra.mxu0 %v202
  %229 = vmatprep.subr.mxu0 0.0
  %230 = vmatpush1.msra.mxu0 %v203
  %231 = vmatprep.subr.mxu0 0.0
  %232 = vmatpush1.msra.mxu0 %v204
  %233 = vmatprep.subr.mxu0 0.0
  %234 = vmatpush1.msra.mxu0 %v205
  %235 = vmatprep.subr.mxu0 0.0
  %236 = vmatpush1.msra.mxu0 %v206
  %237 = vmatprep.subr.mxu0 0.0
  %238 = vmatpush1.msra.mxu0 %v207
  %239 = vmatprep.subr.mxu0 0.0
  %240 = vmatpush1.msra.mxu0 %v208
  %241 = vmatprep.subr.mxu0 0.0
  %242 = vmatpush1.msra.mxu0 0.0
  %243 = vmatprep.subr.mxu0 0.0
  %244 = vmatpush1.msra.mxu0 0.0
  %245 = vmatprep.subr.mxu0 0.0
  %246 = vmatpush1.msra.mxu0 0.0
  %247 = vmatprep.subr.mxu0 0.0
  %248 = vmatpush1.msra.mxu0 0.0
  %249 = vmatprep.subr.mxu0 0.0
  %250 = vmatpush1.msra.mxu0 0.0
  %251 = vmatprep.subr.mxu0 0.0
  %252 = vmatpush1.msra.mxu0 0.0
  %253 = vmatprep.subr.mxu0 0.0
  %254 = vmatpush1.msra.mxu0 0.0
  %255 = vmatprep.subr.mxu0 0.0
  %256 = vmatpush1.msra.mxu0 0.0
  %257 = vmatprep.subr.mxu0 0.0
  %258 = vmatpush1.msra.mxu0 0.0
  %259 = vmatprep.subr.mxu0 0.0
  %260 = vmatpush1.msra.mxu0 0.0
  %261 = vmatprep.subr.mxu0 0.0
  %262 = vmatpush1.msra.mxu0 0.0
  %263 = vmatprep.subr.mxu0 0.0
  %264 = vmatpush1.msra.mxu0 0.0
  %265 = vmatprep.subr.mxu0 0.0
  %266 = vmatpush1.msra.mxu0 0.0
  %267 = vmatprep.subr.mxu0 0.0
  %268 = vmatpush1.msra.mxu0 0.0
  %269 = vmatprep.subr.mxu0 0.0
  %270 = vmatpush1.msra.mxu0 0.0
  %271 = vmatprep.subr.mxu0 0.0
  %272 = vmatpush1.msra.mxu0 0.0
  %273 = vmatprep.mubr.f32.mxu0 0.0
  %274 = vmatmul.mubr.f32.gmra.mrb[0].mxu0 %v16
  %v275 = vpop.f32.mrb[0].mxu0
  %v276 = vadd.f32 0.0, %v275
  %v277 = vpop.f32.mrb[0].mxu0
  %278 = vmatprep.mubr.f32.mxu0 0.0
  %279 = vmatmul.mubr.f32.gmra.mrb[0].mxu0 %v17
  %v280 = vpop.f32.mrb[0].mxu0
  %v281 = vadd.f32 0.0, %v280
  %v282 = vpop.f32.mrb[0].mxu0
  %283 = vmatprep.mubr.f32.mxu0 0.0
  %284 = vmatmul.mubr.f32.gmra.mrb[0].mxu0 %v18
  %v285 = vpop.f32.mrb[0].mxu0
  %v286 = vadd.f32 0.0, %v285
  %v287 = vpop.f32.mrb[0].mxu0
  %288 = vmatprep.mubr.f32.mxu0 0.0
  %289 = vmatmul.mubr.f32.gmra.mrb[0].mxu0 %v19
  %v290 = vpop.f32.mrb[0].mxu0
  %v291 = vadd.f32 0.0, %v290
  %v292 = vpop.f32.mrb[0].mxu0
  %293 = vmatprep.mubr.f32.mxu0 0.0
  %294 = vmatmul.mubr.f32.gmra.mrb[0].mxu0 %v20
  %v295 = vpop.f32.mrb[0].mxu0
  %v296 = vadd.f32 0.0, %v295
  %v297 = vpop.f32.mrb[0].mxu0
  %298 = vmatprep.mubr.f32.mxu0 0.0
  %299 = vmatmul.mubr.f32.gmra.mrb[0].mxu0 %v21
  %v300 = vpop.f32.mrb[0].mxu0
  %v301 = vadd.f32 0.0, %v300
  %v302 = vpop.f32.mrb[0].mxu0
  %303 = vmatprep.mubr.f32.mxu0 0.0
  %304 = vmatmul.mubr.f32.gmra.mrb[0].mxu0 %v22
  %v305 = vpop.f32.mrb[0].mxu0
  %v306 = vadd.f32 0.0, %v305
  %v307 = vpop.f32.mrb[0].mxu0
  %308 = vmatprep.mubr.f32.mxu0 0.0
  %309 = vmatmul.mubr.f32.gmra.mrb[0].mxu0 %v23
  %v310 = vpop.f32.mrb[0].mxu0
  %v311 = vadd.f32 0.0, %v310
  %v312 = vpop.f32.mrb[0].mxu0
  %313 = vmatprep.mubr.f32.mxu0 0.0
  %314 = vmatmul.mubr.f32.gmra.mrb[0].mxu0 %v24
  %v315 = vpop.f32.mrb[0].mxu0
  %v316 = vadd.f32 0.0, %v315
  %v317 = vpop.f32.mrb[0].mxu0
  %318 = vmatprep.mubr.f32.mxu0 0.0
  %319 = vmatmul.mubr.f32.gmra.mrb[0].mxu0 %v25
  %v320 = vpop.f32.mrb[0].mxu0
  %v321 = vadd.f32 0.0, %v320
  %v322 = vpop.f32.mrb[0].mxu0
  %323 = vmatprep.mubr.f32.mxu0 0.0
  %324 = vmatmul.mubr.f32.gmra.mrb[0].mxu0 %v26
  %v325 = vpop.f32.mrb[0].mxu0
  %v326 = vadd.f32 0.0, %v325
  %v327 = vpop.f32.mrb[0].mxu0
  %328 = vmatprep.mubr.f32.mxu0 0.0
  %329 = vmatmul.mubr.f32.gmra.mrb[0].mxu0 %v27
  %v330 = vpop.f32.mrb[0].mxu0
  %v331 = vadd.f32 0.0, %v330
  %v332 = vpop.f32.mrb[0].mxu0
  %333 = vmatprep.mubr.f32.mxu0 0.0
  %334 = vmatmul.mubr.f32.gmra.mrb[0].mxu0 %v28
  %v335 = vpop.f32.mrb[0].mxu0
  %v336 = vadd.f32 0.0, %v335
  %v337 = vpop.f32.mrb[0].mxu0
  %338 = vmatprep.mubr.f32.mxu0 0.0
  %339 = vmatmul.mubr.f32.gmra.mrb[0].mxu0 %v29
  %v340 = vpop.f32.mrb[0].mxu0
  %v341 = vadd.f32 0.0, %v340
  %v342 = vpop.f32.mrb[0].mxu0
  %343 = vmatprep.mubr.f32.mxu0 0.0
  %344 = vmatmul.mubr.f32.gmra.mrb[0].mxu0 %v30
  %v345 = vpop.f32.mrb[0].mxu0
  %v346 = vadd.f32 0.0, %v345
  %v347 = vpop.f32.mrb[0].mxu0
  %348 = vmatprep.mubr.f32.mxu0 0.0
  %349 = vmatmul.mubr.f32.gmra.mrb[0].mxu0 %v31
  %v350 = vpop.f32.mrb[0].mxu0
  %v351 = vadd.f32 0.0, %v350
  %v352 = vpop.f32.mrb[0].mxu0
  %353 = vdwg.mxu0
  %354 = vst [vmem:[%s3] sm:$0xff] %v115
  %355 = vst [vmem:[%s3 + $0x8] sm:$0xff] %v120
  %356 = vst [vmem:[%s3 + $0x10] sm:$0xff] %v125
  %357 = vst [vmem:[%s3 + $0x18] sm:$0xff] %v130
  %358 = vst [vmem:[%s3 + $0x20] sm:$0xff] %v135
  %359 = vst [vmem:[%s3 + $0x28] sm:$0xff] %v140
  %360 = vst [vmem:[%s3 + $0x30] sm:$0xff] %v145
  %361 = vst [vmem:[%s3 + $0x38] sm:$0xff] %v150
  %362 = vst [vmem:[%s3 + $0x40] sm:$0xff] %v155
  %363 = vst [vmem:[%s3 + $0x48] sm:$0xff] %v160
  %364 = vst [vmem:[%s3 + $0x50] sm:$0xff] %v165
  %365 = vst [vmem:[%s3 + $0x58] sm:$0xff] %v170
  %366 = vst [vmem:[%s3 + $0x60] sm:$0xff] %v175
  %367 = vst [vmem:[%s3 + $0x68] sm:$0xff] %v180
  %368 = vst [vmem:[%s3 + $0x70] sm:$0xff] %v185
  %369 = vst [vmem:[%s3 + $0x78] sm:$0xff] %v190
  %370 = vst [vmem:[%s4] sm:$0xff] %v276
  %371 = vst [vmem:[%s4 + $0x8] sm:$0xff] %v281
  %372 = vst [vmem:[%s4 + $0x10] sm:$0xff] %v286
  %373 = vst [vmem:[%s4 + $0x18] sm:$0xff] %v291
  %374 = vst [vmem:[%s4 + $0x20] sm:$0xff] %v296
  %375 = vst [vmem:[%s4 + $0x28] sm:$0xff] %v301
  %376 = vst [vmem:[%s4 + $0x30] sm:$0xff] %v306
  %377 = vst [vmem:[%s4 + $0x38] sm:$0xff] %v311
  %378 = vst [vmem:[%s4 + $0x40] sm:$0xff] %v316
  %379 = vst [vmem:[%s4 + $0x48] sm:$0xff] %v321
  %380 = vst [vmem:[%s4 + $0x50] sm:$0xff] %v326
  %381 = vst [vmem:[%s4 + $0x58] sm:$0xff] %v331
  %382 = vst [vmem:[%s4 + $0x60] sm:$0xff] %v336
  %383 = vst [vmem:[%s4 + $0x68] sm:$0xff] %v341
  %384 = vst [vmem:[%s4 + $0x70] sm:$0xff] %v346
  %385 = vst [vmem:[%s4 + $0x78] sm:$0xff] %v351
  // Predicated region
  $region14: #{graph_conv.2} parent=0 // pred_check
    _
  $region15: #{graph_conv.2} parent=0 // pred_check_branch
    %387 = sbr.rel (0) target = $region17
  $region16: #{graph_conv.2} parent=0 // pred_region
    _
  $region17: #{graph_conv.2} parent=0 // pred_fallthru
    _
  // Predicated region
  $region18: #{graph_conv.2} parent=0 // pred_check
    _
  $region19: #{graph_conv.2} parent=0 // pred_check_branch
    %389 = sbr.rel (0) target = $region21
  $region20: #{graph_conv.2} parent=0 // pred_region
    _
  $region21: #{graph_conv.2} parent=0 // pred_fallthru
    _
  // Predicated region
  $region22: #{graph_conv.2} parent=0 // pred_check
    _
  $region23: #{graph_conv.2} parent=0 // pred_check_branch
    %391 = sbr.rel (0) target = $region25
  $region24: #{graph_conv.2} parent=0 // pred_region
    _
  $region25: #{graph_conv.2} parent=0 // pred_fallthru
    _
  // Predicated region
  $region26: #{graph_conv.2} parent=0 // pred_check
    _
  $region27: #{graph_conv.2} parent=0 // pred_check_branch
    %393 = sbr.rel (0) target = $region29
  $region28: #{graph_conv.2} parent=0 // pred_region
    _
  $region29: #{graph_conv.2} parent=0 // pred_fallthru
    _

// kernel: graph_conv.3
$region0: #{graph_conv.3}
  #allocation0 [shape = 'u32[]', space=smem, size = 0x4, offset = 0x4, fixed_abs, tag = 'smem constant byte address 0x4 - core index']
  #allocation1 [shape = 'u32[144,128]{1,0:T(1,128)}', space=vmem, size = 0x12000, scoped, tag = 'internal scratch']
  #allocation2 [shape = 'f32[128,128]{1,0:T(8,128)}', space=vmem, size = 0x10000, scoped, tag = 'scratch operand']
  %s0 = inlined_call_operand.vmem [shape: f32[128,128], index: 0, kind: input, shape index: {}]
  %s1 = inlined_call_operand.vmem [shape: f32[128,128], index: 1, kind: input, shape index: {}]
  %s2 = inlined_call_operand.vmem [shape: f32[128,128], index: 2, kind: input, shape index: {}]
  %s3 = inlined_call_operand.vmem [shape: f32[128,128], index: 3, kind: output, shape index: {}]
  %s4 = sld [smem:[#allocation0]]
  $region34: #{graph_conv.3} parent=0
    _
  %s6 = ssub.s32 1, %s4
  %s7 = scalar_select 0, %s6, %s4
  // Predicated region
  $region2: #{graph_conv.3} parent=0 // pred_check
    _
  $region3: #{graph_conv.3} parent=0 // pred_check_branch
    %9 = sbr.rel (0) target = $region5
  $region4: #{graph_conv.3} parent=0 // pred_region
    _
  $region5: #{graph_conv.3} parent=0 // pred_fallthru
    _
  // Predicated region
  $region6: #{graph_conv.3} parent=0 // pred_check
    _
  $region7: #{graph_conv.3} parent=0 // pred_check_branch
    %11 = sbr.rel (0) target = $region9
  $region8: #{graph_conv.3} parent=0 // pred_region
    _
  $region9: #{graph_conv.3} parent=0 // pred_fallthru
    _
  // Predicated region
  $region10: #{graph_conv.3} parent=0 // pred_check
    _
  $region11: #{graph_conv.3} parent=0 // pred_check_branch
    %13 = sbr.rel (0) target = $region13
  $region12: #{graph_conv.3} parent=0 // pred_region
    _
  $region13: #{graph_conv.3} parent=0 // pred_fallthru
    _
  %v14 = vld [vmem:[%s0] sm:$0xff]
  %v15 = vld [vmem:[%s0 + $0x8] sm:$0xff]
  %v16 = vld [vmem:[%s0 + $0x10] sm:$0xff]
  %v17 = vld [vmem:[%s0 + $0x18] sm:$0xff]
  %v18 = vld [vmem:[%s0 + $0x20] sm:$0xff]
  %v19 = vld [vmem:[%s0 + $0x28] sm:$0xff]
  %v20 = vld [vmem:[%s0 + $0x30] sm:$0xff]
  %v21 = vld [vmem:[%s0 + $0x38] sm:$0xff]
  %v22 = vld [vmem:[%s0 + $0x40] sm:$0xff]
  %v23 = vld [vmem:[%s0 + $0x48] sm:$0xff]
  %v24 = vld [vmem:[%s0 + $0x50] sm:$0xff]
  %v25 = vld [vmem:[%s0 + $0x58] sm:$0xff]
  %v26 = vld [vmem:[%s0 + $0x60] sm:$0xff]
  %v27 = vld [vmem:[%s0 + $0x68] sm:$0xff]
  %v28 = vld [vmem:[%s0 + $0x70] sm:$0xff]
  %v29 = vld [vmem:[%s0 + $0x78] sm:$0xff]
  %v30 = vld [vmem:[%s1] sm:$0xff]
  %v31 = vld [vmem:[%s1 + $0x8] sm:$0xff]
  %v32 = vld [vmem:[%s1 + $0x10] sm:$0xff]
  %v33 = vld [vmem:[%s1 + $0x18] sm:$0xff]
  %v34 = vld [vmem:[%s1 + $0x20] sm:$0xff]
  %v35 = vld [vmem:[%s1 + $0x28] sm:$0xff]
  %v36 = vld [vmem:[%s1 + $0x30] sm:$0xff]
  %v37 = vld [vmem:[%s1 + $0x38] sm:$0xff]
  %v38 = vld [vmem:[%s1 + $0x40] sm:$0xff]
  %v39 = vld [vmem:[%s1 + $0x48] sm:$0xff]
  %v40 = vld [vmem:[%s1 + $0x50] sm:$0xff]
  %v41 = vld [vmem:[%s1 + $0x58] sm:$0xff]
  %v42 = vld [vmem:[%s1 + $0x60] sm:$0xff]
  %v43 = vld [vmem:[%s1 + $0x68] sm:$0xff]
  %v44 = vld [vmem:[%s1 + $0x70] sm:$0xff]
  %v45 = vld [vmem:[%s1 + $0x78] sm:$0xff]
  %46 = vmatprep.subr.mxu0 0.0
  %47 = vmatpush1.msra.mxu0 %v30
  %48 = vmatprep.subr.mxu0 0.0
  %49 = vmatpush1.msra.mxu0 %v31
  %50 = vmatprep.subr.mxu0 0.0
  %51 = vmatpush1.msra.mxu0 %v32
  %52 = vmatprep.subr.mxu0 0.0
  %53 = vmatpush1.msra.mxu0 %v33
  %54 = vmatprep.subr.mxu0 0.0
  %55 = vmatpush1.msra.mxu0 %v34
  %56 = vmatprep.subr.mxu0 0.0
  %57 = vmatpush1.msra.mxu0 %v35
  %58 = vmatprep.subr.mxu0 0.0
  %59 = vmatpush1.msra.mxu0 %v36
  %60 = vmatprep.subr.mxu0 0.0
  %61 = vmatpush1.msra.mxu0 %v37
  %62 = vmatprep.subr.mxu0 0.0
  %63 = vmatpush1.msra.mxu0 %v38
  %64 = vmatprep.subr.mxu0 0.0
  %65 = vmatpush1.msra.mxu0 %v39
  %66 = vmatprep.subr.mxu0 0.0
  %67 = vmatpush1.msra.mxu0 %v40
  %68 = vmatprep.subr.mxu0 0.0
  %69 = vmatpush1.msra.mxu0 %v41
  %70 = vmatprep.subr.mxu0 0.0
  %71 = vmatpush1.msra.mxu0 %v42
  %72 = vmatprep.subr.mxu0 0.0
  %73 = vmatpush1.msra.mxu0 %v43
  %74 = vmatprep.subr.mxu0 0.0
  %75 = vmatpush1.msra.mxu0 %v44
  %76 = vmatprep.subr.mxu0 0.0
  %77 = vmatpush1.msra.mxu0 %v45
  %78 = vmatprep.subr.mxu0 0.0
  %79 = vmatpush1.msra.mxu0 0.0
  %80 = vmatprep.subr.mxu0 0.0
  %81 = vmatpush1.msra.mxu0 0.0
  %82 = vmatprep.subr.mxu0 0.0
  %83 = vmatpush1.msra.mxu0 0.0
  %84 = vmatprep.subr.mxu0 0.0
  %85 = vmatpush1.msra.mxu0 0.0
  %86 = vmatprep.subr.mxu0 0.0
  %87 = vmatpush1.msra.mxu0 0.0
  %88 = vmatprep.subr.mxu0 0.0
  %89 = vmatpush1.msra.mxu0 0.0
  %90 = vmatprep.subr.mxu0 0.0
  %91 = vmatpush1.msra.mxu0 0.0
  %92 = vmatprep.subr.mxu0 0.0
  %93 = vmatpush1.msra.mxu0 0.0
  %94 = vmatprep.subr.mxu0 0.0
  %95 = vmatpush1.msra.mxu0 0.0
  %96 = vmatprep.subr.mxu0 0.0
  %97 = vmatpush1.msra.mxu0 0.0
  %98 = vmatprep.subr.mxu0 0.0
  %99 = vmatpush1.msra.mxu0 0.0
  %100 = vmatprep.subr.mxu0 0.0
  %101 = vmatpush1.msra.mxu0 0.0
  %102 = vmatprep.subr.mxu0 0.0
  %103 = vmatpush1.msra.mxu0 0.0
  %104 = vmatprep.subr.mxu0 0.0
  %105 = vmatpush1.msra.mxu0 0.0
  %106 = vmatprep.subr.mxu0 0.0
  %107 = vmatpush1.msra.mxu0 0.0
  %108 = vmatprep.subr.mxu0 0.0
  %109 = vmatpush1.msra.mxu0 0.0
  %110 = vmatprep.mubr.f32.mxu0 0.0
  %111 = vmatmul.mubr.f32.gmra.mrb[0].mxu0 %v14
  %v112 = vpop.f32.mrb[0].mxu0
  %v113 = vadd.f32 0.0, %v112
  %v114 = vpop.f32.mrb[0].mxu0
  %115 = vmatprep.mubr.f32.mxu0 0.0
  %116 = vmatmul.mubr.f32.gmra.mrb[0].mxu0 %v15
  %v117 = vpop.f32.mrb[0].mxu0
  %v118 = vadd.f32 0.0, %v117
  %v119 = vpop.f32.mrb[0].mxu0
  %120 = vmatprep.mubr.f32.mxu0 0.0
  %121 = vmatmul.mubr.f32.gmra.mrb[0].mxu0 %v16
  %v122 = vpop.f32.mrb[0].mxu0
  %v123 = vadd.f32 0.0, %v122
  %v124 = vpop.f32.mrb[0].mxu0
  %125 = vmatprep.mubr.f32.mxu0 0.0
  %126 = vmatmul.mubr.f32.gmra.mrb[0].mxu0 %v17
  %v127 = vpop.f32.mrb[0].mxu0
  %v128 = vadd.f32 0.0, %v127
  %v129 = vpop.f32.mrb[0].mxu0
  %130 = vmatprep.mubr.f32.mxu0 0.0
  %131 = vmatmul.mubr.f32.gmra.mrb[0].mxu0 %v18
  %v132 = vpop.f32.mrb[0].mxu0
  %v133 = vadd.f32 0.0, %v132
  %v134 = vpop.f32.mrb[0].mxu0
  %135 = vmatprep.mubr.f32.mxu0 0.0
  %136 = vmatmul.mubr.f32.gmra.mrb[0].mxu0 %v19
  %v137 = vpop.f32.mrb[0].mxu0
  %v138 = vadd.f32 0.0, %v137
  %v139 = vpop.f32.mrb[0].mxu0
  %140 = vmatprep.mubr.f32.mxu0 0.0
  %141 = vmatmul.mubr.f32.gmra.mrb[0].mxu0 %v20
  %v142 = vpop.f32.mrb[0].mxu0
  %v143 = vadd.f32 0.0, %v142
  %v144 = vpop.f32.mrb[0].mxu0
  %145 = vmatprep.mubr.f32.mxu0 0.0
  %146 = vmatmul.mubr.f32.gmra.mrb[0].mxu0 %v21
  %v147 = vpop.f32.mrb[0].mxu0
  %v148 = vadd.f32 0.0, %v147
  %v149 = vpop.f32.mrb[0].mxu0
  %150 = vmatprep.mubr.f32.mxu0 0.0
  %151 = vmatmul.mubr.f32.gmra.mrb[0].mxu0 %v22
  %v152 = vpop.f32.mrb[0].mxu0
  %v153 = vadd.f32 0.0, %v152
  %v154 = vpop.f32.mrb[0].mxu0
  %155 = vmatprep.mubr.f32.mxu0 0.0
  %156 = vmatmul.mubr.f32.gmra.mrb[0].mxu0 %v23
  %v157 = vpop.f32.mrb[0].mxu0
  %v158 = vadd.f32 0.0, %v157
  %v159 = vpop.f32.mrb[0].mxu0
  %160 = vmatprep.mubr.f32.mxu0 0.0
  %161 = vmatmul.mubr.f32.gmra.mrb[0].mxu0 %v24
  %v162 = vpop.f32.mrb[0].mxu0
  %v163 = vadd.f32 0.0, %v162
  %v164 = vpop.f32.mrb[0].mxu0
  %165 = vmatprep.mubr.f32.mxu0 0.0
  %166 = vmatmul.mubr.f32.gmra.mrb[0].mxu0 %v25
  %v167 = vpop.f32.mrb[0].mxu0
  %v168 = vadd.f32 0.0, %v167
  %v169 = vpop.f32.mrb[0].mxu0
  %170 = vmatprep.mubr.f32.mxu0 0.0
  %171 = vmatmul.mubr.f32.gmra.mrb[0].mxu0 %v26
  %v172 = vpop.f32.mrb[0].mxu0
  %v173 = vadd.f32 0.0, %v172
  %v174 = vpop.f32.mrb[0].mxu0
  %175 = vmatprep.mubr.f32.mxu0 0.0
  %176 = vmatmul.mubr.f32.gmra.mrb[0].mxu0 %v27
  %v177 = vpop.f32.mrb[0].mxu0
  %v178 = vadd.f32 0.0, %v177
  %v179 = vpop.f32.mrb[0].mxu0
  %180 = vmatprep.mubr.f32.mxu0 0.0
  %181 = vmatmul.mubr.f32.gmra.mrb[0].mxu0 %v28
  %v182 = vpop.f32.mrb[0].mxu0
  %v183 = vadd.f32 0.0, %v182
  %v184 = vpop.f32.mrb[0].mxu0
  %185 = vmatprep.mubr.f32.mxu0 0.0
  %186 = vmatmul.mubr.f32.gmra.mrb[0].mxu0 %v29
  %v187 = vpop.f32.mrb[0].mxu0
  %v188 = vadd.f32 0.0, %v187
  %v189 = vpop.f32.mrb[0].mxu0
  %190 = vdwg.mxu0
  %p191 = scmp.eq.s32.totalorder 0, 0
  // Predicated region
  $region14: #{graph_conv.3} parent=0 // pred_check
    %p192 = pneg %p191
  $region15: #{graph_conv.3} parent=0 // pred_check_branch
    %194 = sbr.rel (%p192) target = $region17
  $region16: #{graph_conv.3} parent=0 // pred_region
    %v195 = vld [vmem:[%s2] sm:$0xff]
    %v196 = vld [vmem:[%s2 + $0x8] sm:$0xff]
    %v197 = vld [vmem:[%s2 + $0x10] sm:$0xff]
    %v198 = vld [vmem:[%s2 + $0x18] sm:$0xff]
    %v199 = vld [vmem:[%s2 + $0x20] sm:$0xff]
    %v200 = vld [vmem:[%s2 + $0x28] sm:$0xff]
    %v201 = vld [vmem:[%s2 + $0x30] sm:$0xff]
    %v202 = vld [vmem:[%s2 + $0x38] sm:$0xff]
    %v203 = vld [vmem:[%s2 + $0x40] sm:$0xff]
    %v204 = vld [vmem:[%s2 + $0x48] sm:$0xff]
    %v205 = vld [vmem:[%s2 + $0x50] sm:$0xff]
    %v206 = vld [vmem:[%s2 + $0x58] sm:$0xff]
    %v207 = vld [vmem:[%s2 + $0x60] sm:$0xff]
    %v208 = vld [vmem:[%s2 + $0x68] sm:$0xff]
    %v209 = vld [vmem:[%s2 + $0x70] sm:$0xff]
    %v210 = vld [vmem:[%s2 + $0x78] sm:$0xff]
    %v211 = vadd.f32 %v113, %v195
    %v212 = vadd.f32 %v118, %v196
    %v213 = vadd.f32 %v123, %v197
    %v214 = vadd.f32 %v128, %v198
    %v215 = vadd.f32 %v133, %v199
    %v216 = vadd.f32 %v138, %v200
    %v217 = vadd.f32 %v143, %v201
    %v218 = vadd.f32 %v148, %v202
    %v219 = vadd.f32 %v153, %v203
    %v220 = vadd.f32 %v158, %v204
    %v221 = vadd.f32 %v163, %v205
    %v222 = vadd.f32 %v168, %v206
    %v223 = vadd.f32 %v173, %v207
    %v224 = vadd.f32 %v178, %v208
    %v225 = vadd.f32 %v183, %v209
    %v226 = vadd.f32 %v188, %v210
    %227 = vst [vmem:[#allocation2] sm:$0xff] %v211
    %228 = vst [vmem:[#allocation2 + $0x8] sm:$0xff] %v212
    %229 = vst [vmem:[#allocation2 + $0x10] sm:$0xff] %v213
    %230 = vst [vmem:[#allocation2 + $0x18] sm:$0xff] %v214
    %231 = vst [vmem:[#allocation2 + $0x20] sm:$0xff] %v215
    %232 = vst [vmem:[#allocation2 + $0x28] sm:$0xff] %v216
    %233 = vst [vmem:[#allocation2 + $0x30] sm:$0xff] %v217
    %234 = vst [vmem:[#allocation2 + $0x38] sm:$0xff] %v218
    %235 = vst [vmem:[#allocation2 + $0x40] sm:$0xff] %v219
    %236 = vst [vmem:[#allocation2 + $0x48] sm:$0xff] %v220
    %237 = vst [vmem:[#allocation2 + $0x50] sm:$0xff] %v221
    %238 = vst [vmem:[#allocation2 + $0x58] sm:$0xff] %v222
    %239 = vst [vmem:[#allocation2 + $0x60] sm:$0xff] %v223
    %240 = vst [vmem:[#allocation2 + $0x68] sm:$0xff] %v224
    %241 = vst [vmem:[#allocation2 + $0x70] sm:$0xff] %v225
    %242 = vst [vmem:[#allocation2 + $0x78] sm:$0xff] %v226
  $region17: #{graph_conv.3} parent=0 // pred_fallthru
    _
  %p243 = scmp.ne.s32.totalorder 0, 0
  // Predicated region
  $region18: #{graph_conv.3} parent=0 // pred_check
    %p244 = pneg %p243
  $region19: #{graph_conv.3} parent=0 // pred_check_branch
    %246 = sbr.rel (%p244) target = $region21
  $region20: #{graph_conv.3} parent=0 // pred_region
    %v247 = vld [vmem:[#allocation2] sm:$0xff]
    %v248 = vld [vmem:[#allocation2 + $0x8] sm:$0xff]
    %v249 = vld [vmem:[#allocation2 + $0x10] sm:$0xff]
    %v250 = vld [vmem:[#allocation2 + $0x18] sm:$0xff]
    %v251 = vld [vmem:[#allocation2 + $0x20] sm:$0xff]
    %v252 = vld [vmem:[#allocation2 + $0x28] sm:$0xff]
    %v253 = vld [vmem:[#allocation2 + $0x30] sm:$0xff]
    %v254 = vld [vmem:[#allocation2 + $0x38] sm:$0xff]
    %v255 = vld [vmem:[#allocation2 + $0x40] sm:$0xff]
    %v256 = vld [vmem:[#allocation2 + $0x48] sm:$0xff]
    %v257 = vld [vmem:[#allocation2 + $0x50] sm:$0xff]
    %v258 = vld [vmem:[#allocation2 + $0x58] sm:$0xff]
    %v259 = vld [vmem:[#allocation2 + $0x60] sm:$0xff]
    %v260 = vld [vmem:[#allocation2 + $0x68] sm:$0xff]
    %v261 = vld [vmem:[#allocation2 + $0x70] sm:$0xff]
    %v262 = vld [vmem:[#allocation2 + $0x78] sm:$0xff]
    %v263 = vadd.f32 %v247, %v113
    %v264 = vadd.f32 %v248, %v118
    %v265 = vadd.f32 %v249, %v123
    %v266 = vadd.f32 %v250, %v128
    %v267 = vadd.f32 %v251, %v133
    %v268 = vadd.f32 %v252, %v138
    %v269 = vadd.f32 %v253, %v143
    %v270 = vadd.f32 %v254, %v148
    %v271 = vadd.f32 %v255, %v153
    %v272 = vadd.f32 %v256, %v158
    %v273 = vadd.f32 %v257, %v163
    %v274 = vadd.f32 %v258, %v168
    %v275 = vadd.f32 %v259, %v173
    %v276 = vadd.f32 %v260, %v178
    %v277 = vadd.f32 %v261, %v183
    %v278 = vadd.f32 %v262, %v188
    %279 = vst [vmem:[#allocation2] sm:$0xff] %v263
    %280 = vst [vmem:[#allocation2 + $0x8] sm:$0xff] %v264
    %281 = vst [vmem:[#allocation2 + $0x10] sm:$0xff] %v265
    %282 = vst [vmem:[#allocation2 + $0x18] sm:$0xff] %v266
    %283 = vst [vmem:[#allocation2 + $0x20] sm:$0xff] %v267
    %284 = vst [vmem:[#allocation2 + $0x28] sm:$0xff] %v268
    %285 = vst [vmem:[#allocation2 + $0x30] sm:$0xff] %v269
    %286 = vst [vmem:[#allocation2 + $0x38] sm:$0xff] %v270
    %287 = vst [vmem:[#allocation2 + $0x40] sm:$0xff] %v271
    %288 = vst [vmem:[#allocation2 + $0x48] sm:$0xff] %v272
    %289 = vst [vmem:[#allocation2 + $0x50] sm:$0xff] %v273
    %290 = vst [vmem:[#allocation2 + $0x58] sm:$0xff] %v274
    %291 = vst [vmem:[#allocation2 + $0x60] sm:$0xff] %v275
    %292 = vst [vmem:[#allocation2 + $0x68] sm:$0xff] %v276
    %293 = vst [vmem:[#allocation2 + $0x70] sm:$0xff] %v277
    %294 = vst [vmem:[#allocation2 + $0x78] sm:$0xff] %v278
  $region21: #{graph_conv.3} parent=0 // pred_fallthru
    _
  // Predicated region
  $region22: #{graph_conv.3} parent=0 // pred_check
    %p295 = pneg %p191
  $region23: #{graph_conv.3} parent=0 // pred_check_branch
    %297 = sbr.rel (%p295) target = $region25
  $region24: #{graph_conv.3} parent=0 // pred_region
    %v298 = vld [vmem:[#allocation2] sm:$0xff]
    %v299 = vld [vmem:[#allocation2 + $0x8] sm:$0xff]
    %v300 = vld [vmem:[#allocation2 + $0x10] sm:$0xff]
    %v301 = vld [vmem:[#allocation2 + $0x18] sm:$0xff]
    %v302 = vld [vmem:[#allocation2 + $0x20] sm:$0xff]
    %v303 = vld [vmem:[#allocation2 + $0x28] sm:$0xff]
    %v304 = vld [vmem:[#allocation2 + $0x30] sm:$0xff]
    %v305 = vld [vmem:[#allocation2 + $0x38] sm:$0xff]
    %v306 = vld [vmem:[#allocation2 + $0x40] sm:$0xff]
    %v307 = vld [vmem:[#allocation2 + $0x48] sm:$0xff]
    %v308 = vld [vmem:[#allocation2 + $0x50] sm:$0xff]
    %v309 = vld [vmem:[#allocation2 + $0x58] sm:$0xff]
    %v310 = vld [vmem:[#allocation2 + $0x60] sm:$0xff]
    %v311 = vld [vmem:[#allocation2 + $0x68] sm:$0xff]
    %v312 = vld [vmem:[#allocation2 + $0x70] sm:$0xff]
    %v313 = vld [vmem:[#allocation2 + $0x78] sm:$0xff]
    %v314 = vmax.f32 %v298, 0.0
    %v315 = vmax.f32 %v299, 0.0
    %v316 = vmax.f32 %v300, 0.0
    %v317 = vmax.f32 %v301, 0.0
    %v318 = vmax.f32 %v302, 0.0
    %v319 = vmax.f32 %v303, 0.0
    %v320 = vmax.f32 %v304, 0.0
    %v321 = vmax.f32 %v305, 0.0
    %v322 = vmax.f32 %v306, 0.0
    %v323 = vmax.f32 %v307, 0.0
    %v324 = vmax.f32 %v308, 0.0
    %v325 = vmax.f32 %v309, 0.0
    %v326 = vmax.f32 %v310, 0.0
    %v327 = vmax.f32 %v311, 0.0
    %v328 = vmax.f32 %v312, 0.0
    %v329 = vmax.f32 %v313, 0.0
    %330 = vst [vmem:[%s3] sm:$0xff] %v314
    %331 = vst [vmem:[%s3 + $0x8] sm:$0xff] %v315
    %332 = vst [vmem:[%s3 + $0x10] sm:$0xff] %v316
    %333 = vst [vmem:[%s3 + $0x18] sm:$0xff] %v317
    %334 = vst [vmem:[%s3 + $0x20] sm:$0xff] %v318
    %335 = vst [vmem:[%s3 + $0x28] sm:$0xff] %v319
    %336 = vst [vmem:[%s3 + $0x30] sm:$0xff] %v320
    %337 = vst [vmem:[%s3 + $0x38] sm:$0xff] %v321
    %338 = vst [vmem:[%s3 + $0x40] sm:$0xff] %v322
    %339 = vst [vmem:[%s3 + $0x48] sm:$0xff] %v323
    %340 = vst [vmem:[%s3 + $0x50] sm:$0xff] %v324
    %341 = vst [vmem:[%s3 + $0x58] sm:$0xff] %v325
    %342 = vst [vmem:[%s3 + $0x60] sm:$0xff] %v326
    %343 = vst [vmem:[%s3 + $0x68] sm:$0xff] %v327
    %344 = vst [vmem:[%s3 + $0x70] sm:$0xff] %v328
    %345 = vst [vmem:[%s3 + $0x78] sm:$0xff] %v329
  $region25: #{graph_conv.3} parent=0 // pred_fallthru
    _
  // Predicated region
  $region26: #{graph_conv.3} parent=0 // pred_check
    _
  $region27: #{graph_conv.3} parent=0 // pred_check_branch
    %347 = sbr.rel (0) target = $region29
  $region28: #{graph_conv.3} parent=0 // pred_region
    _
  $region29: #{graph_conv.3} parent=0 // pred_fallthru
    _
  // Predicated region
  $region30: #{graph_conv.3} parent=0 // pred_check
    _
  $region31: #{graph_conv.3} parent=0 // pred_check_branch
    %349 = sbr.rel (0) target = $region33
  $region32: #{graph_conv.3} parent=0 // pred_region
    _
  $region33: #{graph_conv.3} parent=0 // pred_fallthru
    _

</llo_original>
